<compile_context>
chip_gen: v7x
topology: tpu7x:2x2x1
jax: 0.10.0
libtpu: 0.0.40
codegen_flags: <defaults>
</compile_context>

<pallas_src>
import functools

import jax
import jax.numpy as jnp
from jax import lax
from jax.experimental import pallas as pl
from jax.experimental.pallas import tpu as pltpu

BN_EPS = 1e-5


# ---------------------------------------------------------------------------
# helpers
# ---------------------------------------------------------------------------
def _round_up(x, m):
    return (x + m - 1) // m * m


def _pick_m_tiling(m, *, tm_cap=8192, split_min=4096):
    """Choose (tile_m, parallel_groups, padded_m) for the pass-1 grid.

    Large lane/sublane-aligned tiles (up to tm_cap) keep HBM DMAs near roofline and
    amortize per-step overhead; g=2 gives v7x's two TensorCores independent partials.
    Padding rows are zero patches and contribute exactly 0 to the BN statistics.
    """
    g = 2 if m >= split_min else 1
    steps = pl.cdiv(m, g * tm_cap)                 # sequential ("arbitrary") steps per group
    tm = _round_up(pl.cdiv(m, g * steps), 8)
    return tm, g, tm * g * steps


# ---------------------------------------------------------------------------
# Pass 1: span-packed conv matmul (bf16 in, f32 MXU acc) + BN statistics
# ---------------------------------------------------------------------------
def conv_stats_kernel(p_ref, w_ref, y_ref, sum_ref, ssq_ref):
    # p_ref: (TM, Kp) bf16   w_ref: (Kp, 128) bf16   y_ref: (TM, 128) bf16 (lane dense)
    # sum_ref / ssq_ref: (1, 1, 128) f32 accumulators, resident across the step axis.
    @pl.when(pl.program_id(1) == 0)
    def _init():
        sum_ref[...] = jnp.zeros_like(sum_ref)
        ssq_ref[...] = jnp.zeros_like(ssq_ref)

    y = jnp.dot(p_ref[...], w_ref[...], preferred_element_type=jnp.float32)
    y_ref[...] = y.astype(y_ref.dtype)
    sum_ref[...] += jnp.sum(y, axis=0).reshape(sum_ref.shape)
    ssq_ref[...] += jnp.sum(y * y, axis=0).reshape(ssq_ref.shape)


# ---------------------------------------------------------------------------
# Pass 2: fused BatchNorm(scale,bias) + ReLU + MaxPool2d(3, 2, pad=1)
# Input layout per image: (OH, PW, 128) where lanes[:64]  = conv at col 2t,
#                                             lanes[64:]  = conv at col 2t+1.
# ---------------------------------------------------------------------------
def bn_relu_pool_kernel(y_ref, scale_ref, bias_ref, o_ref, *, oh, ow, ph, pw, cout):
    y = y_ref[0].astype(jnp.float32)                            # (oh, pw, 128)
    y = jnp.maximum(y * scale_ref[...] + bias_ref[...], 0.0)    # fused BN + ReLU

    if ow % 2 == 1:
        # phantom odd column (conv col == ow) must not win the pool max: clamp to 0
        col = lax.broadcasted_iota(jnp.int32, y.shape, 1)
        lane = lax.broadcasted_iota(jnp.int32, y.shape, 2)
        y = jnp.where((col == pw - 1) & (lane >= cout), 0.0, y)

    def wpool_store(hband, r0):
        # hband: (rows, pw, 128) H-pooled band; store pooled rows [r0, r0+rows).
        # pool col t = max(conv cols 2t-1, 2t, 2t+1); left neighbor 2t-1 is odd half of t-1.
        m1 = jnp.maximum(hband[..., :cout], hband[..., cout:])   # (rows, pw, cout)
        rows = hband.shape[0]
        o_ref[0, r0:r0 + rows, 0:1, :] = m1[:, 0:1, :]           # t=0: left neighbor is pad
        if pw > 1:
            o_ref[0, r0:r0 + rows, 1:, :] = jnp.maximum(m1[:, 1:, :],
                                                        hband[:, :pw - 1, cout:])

    # H pooling: pooled row p = max(conv rows 2p-1, 2p, 2p+1); zero pads are safe post-ReLU.
    nb = oh // 2                          # number of odd conv rows (ph = ceil(oh/2))
    center = y[0::2]                      # conv rows 2p      (ph, pw, 128)
    if nb == 0:                           # oh == 1
        wpool_store(center, 0)
    else:
        odd = y[1::2]                     # conv rows 2p+1    (nb, pw, 128)
        cn = jnp.maximum(center[:nb], odd)                       # center & "next"
        wpool_store(cn[0:1], 0)                                  # row 0 has no "prev"
        if nb > 1:
            wpool_store(jnp.maximum(cn[1:], odd[:nb - 1]), 1)    # rows [1, nb)
        if ph > nb:                                              # oh odd: last row has no "next"
            wpool_store(jnp.maximum(center[nb:], odd[nb - 1:]), nb)


# ---------------------------------------------------------------------------
# Wrapper
# ---------------------------------------------------------------------------
def net_forward(x_nchw, conv_w, bn_gamma, bn_beta):
    """Forward of Net. x_nchw: (N, 3, H, W) f32 -> (N, 64, H//4, W//4) f32 (NCHW)."""
    n, cin, h, w = x_nchw.shape
    cout, _, kh, kw = conv_w.shape
    stride, pad = 2, 3

    oh = (h + 2 * pad - kh) // stride + 1
    ow = (w + 2 * pad - kw) // stride + 1
    ph = (oh - 1) // 2 + 1                 # pooled height
    pw = (ow - 1) // 2 + 1                 # pooled width == packed conv width
    span = kw + stride                     # 9: covers the windows of conv cols 2t and 2t+1
    k = kh * span * cin                    # 189
    kp = _round_up(k, 128)                 # 256 (lane-aligned contraction dim)
    c2 = 2 * cout                          # 128 packed output lanes

    # --- span-patch im2col, entirely in bf16, single fused pad (no big transpose) ---
    wp_need = max(w + 2 * pad, (pw - 1) * 2 * stride + span)
    xb = jnp.transpose(x_nchw, (0, 2, 3, 1)).astype(jnp.bfloat16)          # small NHWC copy
    xp = jnp.pad(xb, ((0, 0), (pad, pad), (pad, wp_need - w - pad), (0, 0)))
    taps = [xp[:, ki:ki + stride * oh:stride, sj:sj + 2 * stride * pw:2 * stride, :]
            for ki in range(kh) for sj in range(span)]
    spans = jnp.stack(taps, axis=3)                                        # (N,OH,PW,kh*span,Cin)
    spans = spans.reshape(n * oh * pw, k)                                  # K order (ki, sj, ci)

    m = n * oh * pw
    tm, g, mp = _pick_m_tiling(m)
    steps = mp // (tm * g)
    spans = jnp.pad(spans, ((0, mp - m), (0, kp - k)))                     # one fused bf16 pad

    # Block-structured weight: lanes[:64] = conv col 2t, lanes[64:] = conv col 2t+1.
    wt = jnp.transpose(conv_w, (2, 3, 1, 0))                               # (kh, kw, cin, cout)
    wcomb = jnp.zeros((kh, span, cin, c2), jnp.float32)
    wcomb = wcomb.at[:, 0:kw, :, 0:cout].set(wt)
    wcomb = wcomb.at[:, stride:stride + kw, :, cout:].set(wt)
    wcomb = jnp.pad(wcomb.reshape(k, c2), ((0, kp - k), (0, 0))).astype(jnp.bfloat16)

    def m_index(gi, si):
        return (gi * steps + si, 0)

    y, s_out, q_out = pl.pallas_call(
        conv_stats_kernel,
        out_shape=(jax.ShapeDtypeStruct((mp, c2), jnp.bfloat16),
                   jax.ShapeDtypeStruct((g, 1, c2), jnp.float32),
                   jax.ShapeDtypeStruct((g, 1, c2), jnp.float32)),
        grid=(g, steps),
        in_specs=[pl.BlockSpec((tm, kp), m_index),
                  pl.BlockSpec((kp, c2), lambda gi, si: (0, 0))],
        out_specs=(pl.BlockSpec((tm, c2), m_index),
                   pl.BlockSpec((1, 1, c2), lambda gi, si: (gi, 0, 0)),
                   pl.BlockSpec((1, 1, c2), lambda gi, si: (gi, 0, 0))),
        compiler_params=pltpu.CompilerParams(
            dimension_semantics=("parallel", "arbitrary"),
            vmem_limit_bytes=48 * 1024 * 1024),
    )(spans, wcomb)

    y_lin = y if mp == m else y[:m]
    y_img = y_lin.reshape(n, oh, pw, c2)          # free reshape (rows are (n, oh, t))

    # --- fold BatchNorm (training batch stats, biased variance) into per-channel scale+bias ---
    s_all = s_out.sum(axis=(0, 1))
    q_all = q_out.sum(axis=(0, 1))
    ch_sum = s_all[:cout] + s_all[cout:]
    ch_ssq = q_all[:cout] + q_all[cout:]
    if ow % 2 == 1:
        # remove the phantom odd column's contribution (it is excluded from the real conv output)
        bog = y_img[:, :, pw - 1, cout:].astype(jnp.float32)
        ch_sum = ch_sum - bog.sum(axis=(0, 1))
        ch_ssq = ch_ssq - (bog * bog).sum(axis=(0, 1))
    cnt = jnp.float32(n * oh * ow)
    mean = ch_sum / cnt
    var = jnp.maximum(ch_ssq / cnt - mean * mean, 0.0)     # clamp: E[x^2]-E[x]^2 cancellation
    scale = bn_gamma.astype(jnp.float32) * lax.rsqrt(var + BN_EPS)
    bias = bn_beta.astype(jnp.float32) - mean * scale
    scale2 = jnp.concatenate([scale, scale]).reshape(1, c2)
    bias2 = jnp.concatenate([bias, bias]).reshape(1, c2)

    pooled = pl.pallas_call(
        functools.partial(bn_relu_pool_kernel, oh=oh, ow=ow, ph=ph, pw=pw, cout=cout),
        out_shape=jax.ShapeDtypeStruct((n, ph, pw, cout), jnp.float32),
        grid=(n,),
        in_specs=[pl.BlockSpec((1, oh, pw, c2), lambda b: (b, 0, 0, 0)),
                  pl.BlockSpec((1, c2), lambda b: (0, 0)),
                  pl.BlockSpec((1, c2), lambda b: (0, 0))],
        out_specs=pl.BlockSpec((1, ph, pw, cout), lambda b: (b, 0, 0, 0)),
        compiler_params=pltpu.CompilerParams(dimension_semantics=("parallel",)),
    )(y_img, scale2, bias2)

    # back to PyTorch's NCHW (small final tensor)
    return pooled.transpose(0, 3, 1, 2)


# ---------------------------------------------------------------------------
# Pure-JAX f32 reference (PyTorch semantics) for correctness check
# ---------------------------------------------------------------------------
def net_forward_ref(x_nchw, conv_w, bn_gamma, bn_beta):
    y = lax.conv_general_dilated(
        x_nchw, conv_w, window_strides=(2, 2), padding=((3, 3), (3, 3)),
        dimension_numbers=("NCHW", "OIHW", "NCHW"))
    mean = jnp.mean(y, axis=(0, 2, 3), keepdims=True)
    var = jnp.mean((y - mean) ** 2, axis=(0, 2, 3), keepdims=True)
    y = (y - mean) * lax.rsqrt(var + BN_EPS)
    y = y * bn_gamma.reshape(1, -1, 1, 1) + bn_beta.reshape(1, -1, 1, 1)
    y = jnp.maximum(y, 0.0)
    y = jnp.pad(y, ((0, 0), (0, 0), (1, 1), (1, 1)), constant_values=-jnp.inf)
    y = lax.reduce_window(y, -jnp.inf, lax.max,
                          window_dimensions=(1, 1, 3, 3),
                          window_strides=(1, 1, 2, 2),
                          padding="VALID")
    return y


if __name__ == "__main__":
    key = jax.random.PRNGKey(0)
    k_x, k_w, k_g, k_b = jax.random.split(key, 4)

    # Net implies Cin=3, Cout=64, k=7; small deterministic test shapes.
    N, CIN, H, W = 2, 3, 16, 16
    COUT, KH, KW = 64, 7, 7

    x = jax.random.normal(k_x, (N, CIN, H, W), dtype=jnp.float32)
    conv_w = jax.random.normal(k_w, (COUT, CIN, KH, KW), dtype=jnp.float32) * 0.05
    bn_gamma = 1.0 + 0.1 * jax.random.normal(k_g, (COUT,), dtype=jnp.float32)
    bn_beta = 0.1 * jax.random.normal(k_b, (COUT,), dtype=jnp.float32)

    out = jax.block_until_ready(net_forward(x, conv_w, bn_gamma, bn_beta))
    ref = jax.block_until_ready(net_forward_ref(x, conv_w, bn_gamma, bn_beta))

    assert out.shape == (N, COUT, H // 4, W // 4), out.shape
    # tolerance accounts for bf16 conv inputs / bf16 conv activation (f32 reference)
    assert jnp.allclose(out, ref, atol=5e-2, rtol=5e-2), float(jnp.max(jnp.abs(out - ref)))

    print("KERNEL_OK")
</pallas_src>

<mosaic_0001>
module attributes {stable_mosaic.version = 11 : i64} {
  func.func @conv_stats_kernel(%arg0: i32, %arg1: i32, %arg2: memref<64x256xbf16, #tpu.memory_space<vmem>>, %arg3: memref<256x128xbf16, #tpu.memory_space<vmem>>, %arg4: memref<64x128xbf16, #tpu.memory_space<vmem>>, %arg5: memref<1x1x128xf32, #tpu.memory_space<vmem>>, %arg6: memref<1x1x128xf32, #tpu.memory_space<vmem>>) attributes {dimension_semantics = [#tpu.dimension_semantics<parallel>, #tpu.dimension_semantics<arbitrary>], iteration_bounds = array<i64: 1, 1>, scalar_prefetch = 0 : i64, scratch_operands = 0 : i64, tpu.core_type = #tpu.core_type<tc>, window_params = [{transform_indices = @transform_0, window_bounds = array<i64: 64, 256>}, {pipeline_mode = #tpu.pipeline_mode<synchronous>, transform_indices = @transform_1, window_bounds = array<i64: 256, 128>}, {transform_indices = @transform_2, window_bounds = array<i64: 64, 128>}, {transform_indices = @transform_3, window_bounds = array<i64: 1, 1, 128>}, {transform_indices = @transform_4, window_bounds = array<i64: 1, 1, 128>}]} {
    %c0_i32 = arith.constant 0 : i32
    %0 = arith.cmpi eq, %arg1, %c0_i32 : i32
    %1 = arith.extui %0 : i1 to i32
    %c0_i32_0 = arith.constant 0 : i32
    %2 = arith.cmpi ne, %1, %c0_i32_0 : i32
    scf.if %2 {
      %cst_20 = arith.constant 0.000000e+00 : f32
      %19 = vector.broadcast %cst_20 : f32 to vector<1x1x128xf32>
      %c0_21 = arith.constant 0 : index
      %c0_22 = arith.constant 0 : index
      %c0_23 = arith.constant 0 : index
      %20 = vector.load %arg5[%c0_21, %c0_22, %c0_23] : memref<1x1x128xf32, #tpu.memory_space<vmem>>, vector<1x1x128xf32>
      tpu.vector_store %arg5[%c0_21, %c0_22, %c0_23], %19 {strides = array<i32>} : memref<1x1x128xf32, #tpu.memory_space<vmem>>, vector<1x1x128xf32>,
      %cst_24 = arith.constant 0.000000e+00 : f32
      %21 = vector.broadcast %cst_24 : f32 to vector<1x1x128xf32>
      %c0_25 = arith.constant 0 : index
      %c0_26 = arith.constant 0 : index
      %c0_27 = arith.constant 0 : index
      %22 = vector.load %arg6[%c0_25, %c0_26, %c0_27] : memref<1x1x128xf32, #tpu.memory_space<vmem>>, vector<1x1x128xf32>
      tpu.vector_store %arg6[%c0_25, %c0_26, %c0_27], %21 {strides = array<i32>} : memref<1x1x128xf32, #tpu.memory_space<vmem>>, vector<1x1x128xf32>,
    } else {
    }
    %c0 = arith.constant 0 : index
    %c0_1 = arith.constant 0 : index
    %3 = vector.load %arg2[%c0, %c0_1] : memref<64x256xbf16, #tpu.memory_space<vmem>>, vector<64x256xbf16>
    %c0_2 = arith.constant 0 : index
    %c0_3 = arith.constant 0 : index
    %4 = vector.load %arg3[%c0_2, %c0_3] : memref<256x128xbf16, #tpu.memory_space<vmem>>, vector<256x128xbf16>
    %cst = arith.constant dense<0.000000e+00> : vector<64x128xf32>
    %5 = tpu.matmul %3, %4, %cst {dimension_numbers = #tpu.dot_dimension_numbers<[1], [0], [0], [1], [0, 0, 1, 1], [], []>} : vector<64x256xbf16>, vector<256x128xbf16>, vector<64x128xf32> -> vector<64x128xf32>
    %6 = arith.truncf %5 : vector<64x128xf32> to vector<64x128xbf16>
    %c0_4 = arith.constant 0 : index
    %c0_5 = arith.constant 0 : index
    %7 = vector.load %arg4[%c0_4, %c0_5] : memref<64x128xbf16, #tpu.memory_space<vmem>>, vector<64x128xbf16>
    tpu.vector_store %arg4[%c0_4, %c0_5], %6 {strides = array<i32>} : memref<64x128xbf16, #tpu.memory_space<vmem>>, vector<64x128xbf16>,
    %c0_6 = arith.constant 0 : index
    %c0_7 = arith.constant 0 : index
    %c0_8 = arith.constant 0 : index
    %8 = vector.load %arg5[%c0_6, %c0_7, %c0_8] : memref<1x1x128xf32, #tpu.memory_space<vmem>>, vector<1x1x128xf32>
    %cst_9 = arith.constant dense<0.000000e+00> : vector<128xf32>
    %9 = vector.multi_reduction <add>, %5, %cst_9 [0] : vector<64x128xf32> to vector<128xf32>
    %10 = vector.shape_cast %9 : vector<128xf32> to vector<1x1x128xf32>
    %11 = arith.addf %8, %10 : vector<1x1x128xf32>
    %c0_10 = arith.constant 0 : index
    %c0_11 = arith.constant 0 : index
    %c0_12 = arith.constant 0 : index
    %12 = vector.load %arg5[%c0_10, %c0_11, %c0_12] : memref<1x1x128xf32, #tpu.memory_space<vmem>>, vector<1x1x128xf32>
    tpu.vector_store %arg5[%c0_10, %c0_11, %c0_12], %11 {strides = array<i32>} : memref<1x1x128xf32, #tpu.memory_space<vmem>>, vector<1x1x128xf32>,
    %c0_13 = arith.constant 0 : index
    %c0_14 = arith.constant 0 : index
    %c0_15 = arith.constant 0 : index
    %13 = vector.load %arg6[%c0_13, %c0_14, %c0_15] : memref<1x1x128xf32, #tpu.memory_space<vmem>>, vector<1x1x128xf32>
    %14 = arith.mulf %5, %5 : vector<64x128xf32>
    %cst_16 = arith.constant dense<0.000000e+00> : vector<128xf32>
    %15 = vector.multi_reduction <add>, %14, %cst_16 [0] : vector<64x128xf32> to vector<128xf32>
    %16 = vector.shape_cast %15 : vector<128xf32> to vector<1x1x128xf32>
    %17 = arith.addf %13, %16 : vector<1x1x128xf32>
    %c0_17 = arith.constant 0 : index
    %c0_18 = arith.constant 0 : index
    %c0_19 = arith.constant 0 : index
    %18 = vector.load %arg6[%c0_17, %c0_18, %c0_19] : memref<1x1x128xf32, #tpu.memory_space<vmem>>, vector<1x1x128xf32>
    tpu.vector_store %arg6[%c0_17, %c0_18, %c0_19], %17 {strides = array<i32>} : memref<1x1x128xf32, #tpu.memory_space<vmem>>, vector<1x1x128xf32>,
    return
  }
  func.func @transform_0(%arg0: i32, %arg1: i32) -> (i32, i32) {
    %c1_i32 = arith.constant 1 : i32
    %0 = arith.muli %arg0, %c1_i32 : i32
    %1 = arith.addi %0, %arg1 : i32
    %c0_i32 = arith.constant 0 : i32
    %c0_i32_0 = arith.constant 0 : i32
    return %1, %c0_i32 : i32, i32
  }
  func.func @transform_1(%arg0: i32, %arg1: i32) -> (i32, i32) {
    %c0_i32 = arith.constant 0 : i32
    %c0_i32_0 = arith.constant 0 : i32
    %c0_i32_1 = arith.constant 0 : i32
    return %c0_i32, %c0_i32_0 : i32, i32
  }
  func.func @transform_2(%arg0: i32, %arg1: i32) -> (i32, i32) {
    %c1_i32 = arith.constant 1 : i32
    %0 = arith.muli %arg0, %c1_i32 : i32
    %1 = arith.addi %0, %arg1 : i32
    %c0_i32 = arith.constant 0 : i32
    %c0_i32_0 = arith.constant 0 : i32
    return %1, %c0_i32 : i32, i32
  }
  func.func @transform_3(%arg0: i32, %arg1: i32) -> (i32, i32, i32) {
    %c0_i32 = arith.constant 0 : i32
    %c0_i32_0 = arith.constant 0 : i32
    %c0_i32_1 = arith.constant 0 : i32
    return %arg0, %c0_i32, %c0_i32_0 : i32, i32, i32
  }
  func.func @transform_4(%arg0: i32, %arg1: i32) -> (i32, i32, i32) {
    %c0_i32 = arith.constant 0 : i32
    %c0_i32_0 = arith.constant 0 : i32
    %c0_i32_1 = arith.constant 0 : i32
    return %arg0, %c0_i32, %c0_i32_0 : i32, i32, i32
  }
}

</mosaic_0001>

<llo_original>
// kernel: tpu_custom_call.1
$region0: #{tpu_custom_call.1}
  #allocation0 [shape = 'u32[]', space=smem, size = 0x4, offset = 0x4, fixed_abs, tag = 'smem constant byte address 0x4 - core index']
  #allocation1 [shape = 'u32[144,128]{1,0:T(1,128)}', space=vmem, size = 0x12000, scoped, tag = 'internal scratch']
  %s0 = inlined_call_operand.hbm [shape: bf16[64,256], index: 0, kind: input, shape index: {}]
  %s1 = inlined_call_operand.hbm [shape: bf16[256,128], index: 1, kind: input, shape index: {}]
  %s2 = inlined_call_operand.hbm [shape: bf16[64,128], index: 2, kind: output, shape index: {0}]
  %s3 = inlined_call_operand.hbm [shape: f32[1,1,128], index: 3, kind: output, shape index: {1}]
  %s4 = inlined_call_operand.hbm [shape: f32[1,1,128], index: 4, kind: output, shape index: {2}]
  %5 = xla_tuple %s2, %s3, %s4
  %s6 = sld [smem:[#allocation0]]
  $region46: #{tpu_custom_call.1} parent=0
    _
  %s8 = ssub.s32 1, %s6
  %s9 = scalar_select 0, %s8, %s6
  $region1: #{tpu_custom_call.1} parent=0
    #allocation2 [shape = 'u8[32768]{0}', space=vmem, size = 0x8000, scoped, tag = 'input window, operand 0, single buffered']
    #allocation3 [shape = 's32[1]{0}', space=sflag, size = 0x4, scoped, tag = 'scoped memory for tpu_custom_call.1']
    #allocation4 [shape = 's32[1]{0}', space=sflag, size = 0x4, scoped, tag = 'scoped memory for tpu_custom_call.1']
    #allocation5 [shape = 'u8[65536]{0}', space=vmem, size = 0x10000, scoped, tag = 'input window, operand 1, single buffered']
    #allocation6 [shape = 's32[1]{0}', space=sflag, size = 0x4, scoped, tag = 'scoped memory for tpu_custom_call.1']
    #allocation7 [shape = 'u8[16384]{0}', space=vmem, size = 0x4000, scoped, tag = 'output window, operand 0, single buffered']
    #allocation8 [shape = 'u8[512]{0}', space=vmem, size = 0x400, scoped, tag = 'output window, operand 1, single buffered']
    #allocation9 [shape = 's32[1]{0}', space=sflag, size = 0x4, scoped, tag = 'scoped memory for tpu_custom_call.1']
    #allocation10 [shape = 'u8[512]{0}', space=vmem, size = 0x400, scoped, tag = 'output window, operand 2, single buffered']
    %10 = vsyncpa [#allocation3], 0
    %11 = vsyncpa [#allocation6], 0
    %12 = vsyncpa [#allocation4], 0
    %13 = vsyncpa [#allocation9], 0
    // Predicated region
    $region2: #{tpu_custom_call.1} parent=1 // pred_check
      _
    $region3: #{tpu_custom_call.1} parent=1 // pred_check_branch
      %15 = sbr.rel (0) target = $region5
    $region4: #{tpu_custom_call.1} parent=1 // pred_region
      %s16 = sadd.s32 0, 0
      %s17 = smul.u32 8, %s16
      %s19 = ssub.s32 1024, 1024
      %20 = vsyncadd [#allocation3], %s19
      %s21 = smul.addr %s17, 2
      %s22 = smul.addr %s21, 64
      %s23 = scalar_lea.hbm %s0, %s22
      %s24 = sshll.u32 [#allocation2], 4
      %s25 = int_to_ptr.vmem [resolvable:$true] %s24
      %30 = dma.hbm_to_vmem [thread:$0]  %s23, 1024, %s25, [#allocation3], 128, 128, 8
    $region5: #{tpu_custom_call.1} parent=1 // pred_fallthru
      _
    // Predicated region
    $region6: #{tpu_custom_call.1} parent=1 // pred_check
      _
    $region7: #{tpu_custom_call.1} parent=1 // pred_check_branch
      %32 = sbr.rel (0) target = $region9
    $region8: #{tpu_custom_call.1} parent=1 // pred_region
      %s34 = ssub.s32 2048, 2048
      %35 = vsyncadd [#allocation6], %s34
      %s36 = sshll.u32 [#allocation5], 4
      %s37 = int_to_ptr.vmem [resolvable:$true] %s36
      %42 = dma.hbm_to_vmem [thread:$0]  %s1, 2048, %s37, [#allocation6], 64, 64, 4
    $region9: #{tpu_custom_call.1} parent=1 // pred_fallthru
      _
    // Predicated region
    $region10: #{tpu_custom_call.1} parent=1 // pred_check
      _
    $region11: #{tpu_custom_call.1} parent=1 // pred_check_branch
      %44 = sbr.rel (0) target = $region13
    $region12: #{tpu_custom_call.1} parent=1 // pred_region
      %45 = dma.done [#allocation3], 1024
    $region13: #{tpu_custom_call.1} parent=1 // pred_fallthru
      _
    // Predicated region
    $region14: #{tpu_custom_call.1} parent=1 // pred_check
      _
    $region15: #{tpu_custom_call.1} parent=1 // pred_check_branch
      %47 = sbr.rel (0) target = $region17
    $region16: #{tpu_custom_call.1} parent=1 // pred_region
      %48 = dma.done [#allocation6], 2048
    $region17: #{tpu_custom_call.1} parent=1 // pred_fallthru
      _
    %s49 = sadd.s32 0, 0
    %s50 = smul.u32 8, %s49
    %s51 = sadd.s32 0, 0
    %s52 = smul.u32 8, %s51
    %p54 = scmp.eq.s32.totalorder 0, 0
    // Predicated region
    $region18: #{tpu_custom_call.1} parent=1 // pred_check
      %p55 = pneg %p54
    $region19: #{tpu_custom_call.1} parent=1 // pred_check_branch
      %57 = sbr.rel (%p55) target = $region21
    $region20: #{tpu_custom_call.1} parent=1 // pred_region
      %58 = vst [vmem:[#allocation8] sm:$0x1] 0.0
      %59 = vst [vmem:[#allocation10] sm:$0x1] 0.0
    $region21: #{tpu_custom_call.1} parent=1 // pred_fallthru
      _
    %v60 = vld [vmem:[#allocation2] sm:$0xff]
    %v61 = vld [vmem:[#allocation2 + $0x8] sm:$0xff]
    %v62 = vld [vmem:[#allocation2 + $0x10] sm:$0xff]
    %v63 = vld [vmem:[#allocation2 + $0x18] sm:$0xff]
    %v64 = vld [vmem:[#allocation2 + $0x20] sm:$0xff]
    %v65 = vld [vmem:[#allocation2 + $0x28] sm:$0xff]
    %v66 = vld [vmem:[#allocation2 + $0x30] sm:$0xff]
    %v67 = vld [vmem:[#allocation2 + $0x38] sm:$0xff]
    %v68 = vld [vmem:[#allocation5] sm:$0xf]
    %v69 = vld [vmem:[#allocation5 + $0x4] sm:$0xf]
    %v70 = vld [vmem:[#allocation5 + $0x8] sm:$0xf]
    %v71 = vld [vmem:[#allocation5 + $0xc] sm:$0xf]
    %v72 = vld [vmem:[#allocation5 + $0x10] sm:$0xf]
    %v73 = vld [vmem:[#allocation5 + $0x14] sm:$0xf]
    %v74 = vld [vmem:[#allocation5 + $0x18] sm:$0xf]
    %v75 = vld [vmem:[#allocation5 + $0x1c] sm:$0xf]
    %v76 = vld [vmem:[#allocation5 + $0x20] sm:$0xf]
    %v77 = vld [vmem:[#allocation5 + $0x24] sm:$0xf]
    %v78 = vld [vmem:[#allocation5 + $0x28] sm:$0xf]
    %v79 = vld [vmem:[#allocation5 + $0x2c] sm:$0xf]
    %v80 = vld [vmem:[#allocation5 + $0x30] sm:$0xf]
    %v81 = vld [vmem:[#allocation5 + $0x34] sm:$0xf]
    %v82 = vld [vmem:[#allocation5 + $0x38] sm:$0xf]
    %v83 = vld [vmem:[#allocation5 + $0x3c] sm:$0xf]
    %v84 = vld [vmem:[#allocation5 + $0x40] sm:$0xf]
    %v85 = vld [vmem:[#allocation5 + $0x44] sm:$0xf]
    %v86 = vld [vmem:[#allocation5 + $0x48] sm:$0xf]
    %v87 = vld [vmem:[#allocation5 + $0x4c] sm:$0xf]
    %v88 = vld [vmem:[#allocation5 + $0x50] sm:$0xf]
    %v89 = vld [vmem:[#allocation5 + $0x54] sm:$0xf]
    %v90 = vld [vmem:[#allocation5 + $0x58] sm:$0xf]
    %v91 = vld [vmem:[#allocation5 + $0x5c] sm:$0xf]
    %v92 = vld [vmem:[#allocation5 + $0x60] sm:$0xf]
    %v93 = vld [vmem:[#allocation5 + $0x64] sm:$0xf]
    %v94 = vld [vmem:[#allocation5 + $0x68] sm:$0xf]
    %v95 = vld [vmem:[#allocation5 + $0x6c] sm:$0xf]
    %v96 = vld [vmem:[#allocation5 + $0x70] sm:$0xf]
    %v97 = vld [vmem:[#allocation5 + $0x74] sm:$0xf]
    %v98 = vld [vmem:[#allocation5 + $0x78] sm:$0xf]
    %v99 = vld [vmem:[#allocation5 + $0x7c] sm:$0xf]
    %v108 = vunpack.c.l.b16 %v60
    %v109 = vunpack.c.h.b16 %v60
    %v110 = vunpack.c.l.b16 %v61
    %v111 = vunpack.c.h.b16 %v61
    %v112 = vunpack.c.l.b16 %v62
    %v113 = vunpack.c.h.b16 %v62
    %v114 = vunpack.c.l.b16 %v63
    %v115 = vunpack.c.h.b16 %v63
    %v116 = vunpack.c.l.b16 %v64
    %v117 = vunpack.c.h.b16 %v64
    %v118 = vunpack.c.l.b16 %v65
    %v119 = vunpack.c.h.b16 %v65
    %v120 = vunpack.c.l.b16 %v66
    %v121 = vunpack.c.h.b16 %v66
    %v122 = vunpack.c.l.b16 %v67
    %v123 = vunpack.c.h.b16 %v67
    %v124 = vpack.c.b16 %v110, %v108
    %v125 = vpack.c.b16 %v111, %v109
    %v126 = vpack.c.b16 %v114, %v112
    %v127 = vpack.c.b16 %v115, %v113
    %v128 = vpack.c.b16 %v118, %v116
    %v129 = vpack.c.b16 %v119, %v117
    %v130 = vpack.c.b16 %v122, %v120
    %v131 = vpack.c.b16 %v123, %v121
    %v172 = vunpack.c.l.b16 %v68
    %v173 = vunpack.c.l.b16 %v69
    %v174 = vunpack.c.l.b16 %v70
    %v175 = vunpack.c.l.b16 %v71
    %v176 = vunpack.c.l.b16 %v72
    %v177 = vunpack.c.l.b16 %v73
    %v178 = vunpack.c.l.b16 %v74
    %v179 = vunpack.c.l.b16 %v75
    %v180 = vunpack.c.l.b16 %v76
    %v181 = vunpack.c.l.b16 %v77
    %v182 = vunpack.c.l.b16 %v78
    %v183 = vunpack.c.l.b16 %v79
    %v184 = vunpack.c.l.b16 %v80
    %v185 = vunpack.c.l.b16 %v81
    %v186 = vunpack.c.l.b16 %v82
    %v187 = vunpack.c.l.b16 %v83
    %v188 = vunpack.c.l.b16 %v84
    %v189 = vunpack.c.l.b16 %v85
    %v190 = vunpack.c.l.b16 %v86
    %v191 = vunpack.c.l.b16 %v87
    %v192 = vunpack.c.l.b16 %v88
    %v193 = vunpack.c.l.b16 %v89
    %v194 = vunpack.c.l.b16 %v90
    %v195 = vunpack.c.l.b16 %v91
    %v196 = vunpack.c.l.b16 %v92
    %v197 = vunpack.c.l.b16 %v93
    %v198 = vunpack.c.l.b16 %v94
    %v199 = vunpack.c.l.b16 %v95
    %v200 = vunpack.c.l.b16 %v96
    %v201 = vunpack.c.l.b16 %v97
    %v202 = vunpack.c.l.b16 %v98
    %v203 = vunpack.c.l.b16 %v99
    %v204 = vpack.c.b16 %v173, %v172
    %v205 = vpack.c.b16 %v175, %v174
    %v206 = vpack.c.b16 %v177, %v176
    %v207 = vpack.c.b16 %v179, %v178
    %v208 = vpack.c.b16 %v181, %v180
    %v209 = vpack.c.b16 %v183, %v182
    %v210 = vpack.c.b16 %v185, %v184
    %v211 = vpack.c.b16 %v187, %v186
    %v212 = vpack.c.b16 %v189, %v188
    %v213 = vpack.c.b16 %v191, %v190
    %v214 = vpack.c.b16 %v193, %v192
    %v215 = vpack.c.b16 %v195, %v194
    %v216 = vpack.c.b16 %v197, %v196
    %v217 = vpack.c.b16 %v199, %v198
    %v218 = vpack.c.b16 %v201, %v200
    %v219 = vpack.c.b16 %v203, %v202
    %236 = vmatprep.subr.bf16.mxu0 0
    %237 = vmatpush1.bf16.msra.mxu0 %v204
    %238 = vmatprep.subr.bf16.mxu0 0
    %239 = vmatpush1.bf16.msra.mxu0 %v205
    %240 = vmatprep.subr.bf16.mxu0 0
    %241 = vmatpush1.bf16.msra.mxu0 %v206
    %242 = vmatprep.subr.bf16.mxu0 0
    %243 = vmatpush1.bf16.msra.mxu0 %v207
    %244 = vmatprep.subr.bf16.mxu0 0
    %245 = vmatpush1.bf16.msra.mxu0 %v208
    %246 = vmatprep.subr.bf16.mxu0 0
    %247 = vmatpush1.bf16.msra.mxu0 %v209
    %248 = vmatprep.subr.bf16.mxu0 0
    %249 = vmatpush1.bf16.msra.mxu0 %v210
    %250 = vmatprep.subr.bf16.mxu0 0
    %251 = vmatpush1.bf16.msra.mxu0 %v211
    %252 = vmatprep.subr.bf16.mxu0 0
    %253 = vmatpush1.bf16.msra.mxu0 %v212
    %254 = vmatprep.subr.bf16.mxu0 0
    %255 = vmatpush1.bf16.msra.mxu0 %v213
    %256 = vmatprep.subr.bf16.mxu0 0
    %257 = vmatpush1.bf16.msra.mxu0 %v214
    %258 = vmatprep.subr.bf16.mxu0 0
    %259 = vmatpush1.bf16.msra.mxu0 %v215
    %260 = vmatprep.subr.bf16.mxu0 0
    %261 = vmatpush1.bf16.msra.mxu0 %v216
    %262 = vmatprep.subr.bf16.mxu0 0
    %263 = vmatpush1.bf16.msra.mxu0 %v217
    %264 = vmatprep.subr.bf16.mxu0 0
    %265 = vmatpush1.bf16.msra.mxu0 %v218
    %266 = vmatprep.subr.bf16.mxu0 0
    %267 = vmatpush1.bf16.msra.mxu0 %v219
    %268 = vmatprep.mubr.bf16.mxu0 %v125
    %269 = vmatmul.mubr.bf16.gmra.mrb[0].mxu0 %v124
    %v270 = vpop.f32.mrb[0].mxu0
    %v271 = vadd.f32 0.0, %v270
    %v272 = vpop.f32.mrb[0].mxu0
    %v273 = vpop.f32.mrb[0].mxu0
    %v274 = vadd.f32 0.0, %v273
    %v275 = vpop.f32.mrb[0].mxu0
    %276 = vmatprep.mubr.bf16.mxu0 %v127
    %277 = vmatmul.mubr.bf16.gmra.mrb[0].mxu0 %v126
    %v278 = vpop.f32.mrb[0].mxu0
    %v279 = vadd.f32 0.0, %v278
    %v280 = vpop.f32.mrb[0].mxu0
    %v281 = vpop.f32.mrb[0].mxu0
    %v282 = vadd.f32 0.0, %v281
    %v283 = vpop.f32.mrb[0].mxu0
    %284 = vmatprep.mubr.bf16.mxu0 %v129
    %285 = vmatmul.mubr.bf16.gmra.mrb[0].mxu0 %v128
    %v286 = vpop.f32.mrb[0].mxu0
    %v287 = vadd.f32 0.0, %v286
    %v288 = vpop.f32.mrb[0].mxu0
    %v289 = vpop.f32.mrb[0].mxu0
    %v290 = vadd.f32 0.0, %v289
    %v291 = vpop.f32.mrb[0].mxu0
    %292 = vmatprep.mubr.bf16.mxu0 %v131
    %293 = vmatmul.mubr.bf16.gmra.mrb[0].mxu0 %v130
    %v294 = vpop.f32.mrb[0].mxu0
    %v295 = vadd.f32 0.0, %v294
    %v296 = vpop.f32.mrb[0].mxu0
    %v297 = vpop.f32.mrb[0].mxu0
    %v298 = vadd.f32 0.0, %v297
    %v299 = vpop.f32.mrb[0].mxu0
    %300 = vdwg.mxu0
    %v301 = vpack.c.bf16 %v274, %v271
    %v302 = vpack.c.bf16 %v282, %v279
    %v303 = vpack.c.bf16 %v290, %v287
    %v304 = vpack.c.bf16 %v298, %v295
    %v309 = vunpack.c.l.b16 %v301
    %v310 = vunpack.c.h.b16 %v301
    %v311 = vunpack.c.l.b16 %v302
    %v312 = vunpack.c.h.b16 %v302
    %v313 = vunpack.c.l.b16 %v303
    %v314 = vunpack.c.h.b16 %v303
    %v315 = vunpack.c.l.b16 %v304
    %v316 = vunpack.c.h.b16 %v304
    %v317 = vpack.c.b16 %v309, %v309
    %v318 = vpack.c.b16 %v310, %v310
    %v319 = vpack.c.b16 %v311, %v311
    %v320 = vpack.c.b16 %v312, %v312
    %v321 = vpack.c.b16 %v313, %v313
    %v322 = vpack.c.b16 %v314, %v314
    %v323 = vpack.c.b16 %v315, %v315
    %v324 = vpack.c.b16 %v316, %v316
    %333 = vst [vmem:[#allocation7] sm:$0xf] %v317
    %334 = vst [vmem:[#allocation7 + $0x4] sm:$0xf] %v318
    %335 = vst [vmem:[#allocation7 + $0x8] sm:$0xf] %v319
    %336 = vst [vmem:[#allocation7 + $0xc] sm:$0xf] %v320
    %337 = vst [vmem:[#allocation7 + $0x10] sm:$0xf] %v321
    %338 = vst [vmem:[#allocation7 + $0x14] sm:$0xf] %v322
    %339 = vst [vmem:[#allocation7 + $0x18] sm:$0xf] %v323
    %340 = vst [vmem:[#allocation7 + $0x1c] sm:$0xf] %v324
    %v341 = vld [vmem:[#allocation8] sm:$0x1]
    %v342 = vadd.f32 %v271, %v274
    %v343 = vadd.f32 %v342, %v279
    %v344 = vadd.f32 %v343, %v282
    %v345 = vadd.f32 %v344, %v287
    %v346 = vadd.f32 %v345, %v290
    %v347 = vadd.f32 %v346, %v295
    %v348 = vadd.f32 %v347, %v298
    %v349 = vrot.slane %v348, 4
    %v350 = vadd.f32 %v348, %v349
    %v351 = vrot.slane %v350, 2
    %v352 = vadd.f32 %v350, %v351
    %v353 = vrot.slane %v352, 1
    %v354 = vadd.f32 %v352, %v353
    %v355 = vadd.f32 %v341, %v354
    %356 = vst [vmem:[#allocation8] sm:$0x1] %v355
    %v357 = vld [vmem:[#allocation10] sm:$0x1]
    %v358 = vmul.f32 %v271, %v271
    %v359 = vmul.f32 %v274, %v274
    %v360 = vmul.f32 %v279, %v279
    %v361 = vmul.f32 %v282, %v282
    %v362 = vmul.f32 %v287, %v287
    %v363 = vmul.f32 %v290, %v290
    %v364 = vmul.f32 %v295, %v295
    %v365 = vmul.f32 %v298, %v298
    %v366 = vadd.f32 %v358, %v359
    %v367 = vadd.f32 %v366, %v360
    %v368 = vadd.f32 %v367, %v361
    %v369 = vadd.f32 %v368, %v362
    %v370 = vadd.f32 %v369, %v363
    %v371 = vadd.f32 %v370, %v364
    %v372 = vadd.f32 %v371, %v365
    %v373 = vrot.slane %v372, 4
    %v374 = vadd.f32 %v372, %v373
    %v375 = vrot.slane %v374, 2
    %v376 = vadd.f32 %v374, %v375
    %v377 = vrot.slane %v376, 1
    %v378 = vadd.f32 %v376, %v377
    %v379 = vadd.f32 %v357, %v378
    %380 = vst [vmem:[#allocation10] sm:$0x1] %v379
    // Predicated region
    $region22: #{tpu_custom_call.1} parent=1 // pred_check
      _
    $region23: #{tpu_custom_call.1} parent=1 // pred_check_branch
      %382 = sbr.rel (0) target = $region25
    $region24: #{tpu_custom_call.1} parent=1 // pred_region
      %s383 = sadd.s32 0, 0
      %s384 = smul.u32 8, %s383
      %s386 = ssub.s32 512, 512
      %387 = vsyncadd [#allocation4], %s386
      %s388 = smul.addr %s384, 64
      %s389 = scalar_lea.hbm %s2, %s388
      %s390 = sshll.u32 [#allocation7], 4
      %s391 = int_to_ptr.vmem [resolvable:$true] %s390
      %396 = dma.vmem_to_hbm [thread:$0]  %s391, 512, %s389, [#allocation4], 64, 64, 4
    $region25: #{tpu_custom_call.1} parent=1 // pred_fallthru
      _
    // Predicated region
    $region26: #{tpu_custom_call.1} parent=1 // pred_check
      _
    $region27: #{tpu_custom_call.1} parent=1 // pred_check_branch
      %398 = sbr.rel (0) target = $region29
    $region28: #{tpu_custom_call.1} parent=1 // pred_region
      %s400 = ssub.s32 16, 16
      %401 = vsyncadd [#allocation9], %s400
      %s403 = sshll.u32 [#allocation8], 4
      %s404 = int_to_ptr.vmem [resolvable:$true] %s403
      %406 = dma.vmem_to_hbm [thread:$0]  %s404, 16, %s3, [#allocation9]
    $region29: #{tpu_custom_call.1} parent=1 // pred_fallthru
      _
    // Predicated region
    $region30: #{tpu_custom_call.1} parent=1 // pred_check
      _
    $region31: #{tpu_custom_call.1} parent=1 // pred_check_branch
      %408 = sbr.rel (0) target = $region33
    $region32: #{tpu_custom_call.1} parent=1 // pred_region
      %s410 = ssub.s32 16, 16
      %411 = vsyncadd [#allocation9], %s410
      %s413 = sshll.u32 [#allocation10], 4
      %s414 = int_to_ptr.vmem [resolvable:$true] %s413
      %416 = dma.vmem_to_hbm [thread:$0]  %s414, 16, %s4, [#allocation9]
    $region33: #{tpu_custom_call.1} parent=1 // pred_fallthru
      _
    // Predicated region
    $region34: #{tpu_custom_call.1} parent=1 // pred_check
      _
    $region35: #{tpu_custom_call.1} parent=1 // pred_check_branch
      %418 = sbr.rel (0) target = $region37
    $region36: #{tpu_custom_call.1} parent=1 // pred_region
      %419 = dma.done [#allocation4], 512
    $region37: #{tpu_custom_call.1} parent=1 // pred_fallthru
      _
    // Predicated region
    $region38: #{tpu_custom_call.1} parent=1 // pred_check
      _
    $region39: #{tpu_custom_call.1} parent=1 // pred_check_branch
      %421 = sbr.rel (0) target = $region41
    $region40: #{tpu_custom_call.1} parent=1 // pred_region
      %422 = dma.done [#allocation9], 16
    $region41: #{tpu_custom_call.1} parent=1 // pred_fallthru
      _
    // Predicated region
    $region42: #{tpu_custom_call.1} parent=1 // pred_check
      _
    $region43: #{tpu_custom_call.1} parent=1 // pred_check_branch
      %424 = sbr.rel (0) target = $region45
    $region44: #{tpu_custom_call.1} parent=1 // pred_region
      %425 = dma.done [#allocation9], 16
    $region45: #{tpu_custom_call.1} parent=1 // pred_fallthru
      _
    %426 = vsyncpa [#allocation3], 1
    %427 = vsyncpa [#allocation6], 1
    %428 = vsyncpa [#allocation4], 1
    %429 = vsyncpa [#allocation9], 1

</llo_original>
